<compile_context>
chip_gen: v5e
topology: v5e:2x2
jax: 0.10.0
libtpu: 0.0.40
codegen_flags: <defaults>
</compile_context>

<pallas_src>
import functools

import jax
import jax.numpy as jnp
from jax import lax
from jax.experimental import pallas as pl
from jax.experimental.pallas import tpu as pltpu

MARGIN = 5.0
COEFF = 0.25
_PDIST_EPS = 1e-6  # matches torch.nn.functional.pairwise_distance default eps


def _quadruplet_loss_kernel(x1_ref, x2_ref, x3_ref, y_ref, out_ref, *,
                            batch, tile_rows):
    i = pl.program_id(0)

    x1 = x1_ref[...].astype(jnp.float32)
    x2 = x2_ref[...].astype(jnp.float32)
    x3 = x3_ref[...].astype(jnp.float32)
    y = y_ref[...].astype(jnp.float32)

    def rownorm(d):
        # F.pairwise_distance(a, b, p=2) == ||a - b + eps||_2 per row.
        d = d + _PDIST_EPS
        return jnp.sqrt(jnp.sum(d * d, axis=-1, keepdims=True))  # (TB, 1)

    # Shared difference vectors (each input read once, reused).
    a12 = x1 - x2
    a23 = x2 - x3
    a13 = a12 + a23                 # x1 - x3
    dm = (a23 - a12) * 0.5          # x2 - (x1 + x3)/2

    dist_linear = rownorm(dm)
    d12 = rownorm(a12)
    d23 = rownorm(a23)
    d13 = rownorm(a13)
    d_neg = rownorm(x1 - y)

    linear_losses = dist_linear + COEFF * (d12 + d23 + d13)
    triplet_loss = jnp.maximum(d13 - d_neg + MARGIN, 0.0)
    losses = COEFF * linear_losses + triplet_loss  # (TB, 1)

    if batch % tile_rows != 0:
        # Mask out-of-bounds rows of the tail tile (their data is unspecified
        # and an unmasked padded row would add `margin` to the sum).
        row_ids = i * tile_rows + lax.broadcasted_iota(
            jnp.int32, (tile_rows, 1), 0)
        losses = jnp.where(row_ids < batch, losses, 0.0)

    out_ref[0, 0] = jnp.sum(losses)


def _choose_tile_rows(batch, feat, itemsize):
    # Budget: 4 inputs x 2 pipeline buffers x TB x D x itemsize <= ~12 MiB,
    # leaving plenty of headroom under the 32 MiB scoped-VMEM limit requested
    # below (and under v7x's 64 MiB physical VMEM).
    budget_bytes = 12 * 1024 * 1024
    max_rows = max(8, budget_bytes // max(1, 8 * feat * itemsize))
    tb = min(batch, max_rows, 4096)
    if tb != batch:
        tb = max(8, (tb // 8) * 8)  # sublane-aligned unless full batch
    return tb


def improved_quadruplet_loss(rep_x1, rep_x2, rep_x3, rep_y, *, tile_rows=None):
    """Returns the scalar quadruplet loss (float32)."""
    assert rep_x1.shape == rep_x2.shape == rep_x3.shape == rep_y.shape
    assert rep_x1.ndim == 2
    B, D = rep_x1.shape

    if tile_rows is None:
        tile_rows = _choose_tile_rows(B, D, jnp.dtype(rep_x1.dtype).itemsize)
    num_tiles = pl.cdiv(B, tile_rows)

    kernel = functools.partial(
        _quadruplet_loss_kernel, batch=B, tile_rows=tile_rows)

    in_spec = pl.BlockSpec((tile_rows, D), lambda i: (i, 0))

    partial_sums = pl.pallas_call(
        kernel,
        out_shape=jax.ShapeDtypeStruct((num_tiles, 1), jnp.float32),
        grid=(num_tiles,),
        in_specs=[in_spec, in_spec, in_spec, in_spec],
        out_specs=pl.BlockSpec((1, 1), lambda i: (i, 0),
                               memory_space=pltpu.SMEM),
        compiler_params=pltpu.CompilerParams(
            dimension_semantics=("parallel",),
            vmem_limit_bytes=32 * 1024 * 1024),
    )(rep_x1, rep_x2, rep_x3, rep_y)

    return jnp.sum(partial_sums) / jnp.float32(B)


def _reference(rep_x1, rep_x2, rep_x3, rep_y):
    # Pure-JAX reference mirroring the PyTorch module (computed in f32).
    rep_x1 = rep_x1.astype(jnp.float32)
    rep_x2 = rep_x2.astype(jnp.float32)
    rep_x3 = rep_x3.astype(jnp.float32)
    rep_y = rep_y.astype(jnp.float32)

    def pdist(a, b):
        d = a - b + _PDIST_EPS
        return jnp.sqrt(jnp.sum(d * d, axis=-1))

    m = (rep_x1 + rep_x3) / 2.0
    dist_linear = pdist(rep_x2, m)
    d12 = pdist(rep_x1, rep_x2)
    d23 = pdist(rep_x2, rep_x3)
    d13 = pdist(rep_x1, rep_x3)
    linear_losses = dist_linear + COEFF * (d12 + d23 + d13)
    d_neg = pdist(rep_x1, rep_y)
    triplet = jnp.maximum(d13 - d_neg + MARGIN, 0.0)
    return jnp.mean(COEFF * linear_losses + triplet)


if __name__ == "__main__":
    # Test 1: small chart2vec-like batch (single tile).
    B, D = 8, 32
    k1, k2, k3, k4 = jax.random.split(jax.random.PRNGKey(0), 4)
    x1 = jax.random.normal(k1, (B, D), dtype=jnp.float32)
    x2 = jax.random.normal(k2, (B, D), dtype=jnp.float32)
    x3 = jax.random.normal(k3, (B, D), dtype=jnp.float32)
    y = jax.random.normal(k4, (B, D), dtype=jnp.float32)

    loss = improved_quadruplet_loss(x1, x2, x3, y)
    jax.block_until_ready(loss)
    ref = _reference(x1, x2, x3, y)
    assert jnp.allclose(loss, ref, rtol=1e-5, atol=1e-5), (loss, ref)

    # Test 2: exercises batch tiling + tail-tile masking (B % tile_rows != 0).
    B2, D2 = 24, 32
    k5, k6, k7, k8 = jax.random.split(jax.random.PRNGKey(1), 4)
    z1 = jax.random.normal(k5, (B2, D2), dtype=jnp.float32)
    z2 = jax.random.normal(k6, (B2, D2), dtype=jnp.float32)
    z3 = jax.random.normal(k7, (B2, D2), dtype=jnp.float32)
    zy = jax.random.normal(k8, (B2, D2), dtype=jnp.float32)

    loss2 = improved_quadruplet_loss(z1, z2, z3, zy, tile_rows=16)
    jax.block_until_ready(loss2)
    ref2 = _reference(z1, z2, z3, zy)
    assert jnp.allclose(loss2, ref2, rtol=1e-5, atol=1e-5), (loss2, ref2)

    # Test 3: bf16 inputs (kernel casts to f32 internally), default tiling.
    B3, D3 = 48, 128
    k9, k10, k11, k12 = jax.random.split(jax.random.PRNGKey(2), 4)
    w1 = jax.random.normal(k9, (B3, D3), dtype=jnp.bfloat16)
    w2 = jax.random.normal(k10, (B3, D3), dtype=jnp.bfloat16)
    w3 = jax.random.normal(k11, (B3, D3), dtype=jnp.bfloat16)
    wy = jax.random.normal(k12, (B3, D3), dtype=jnp.bfloat16)

    loss3 = improved_quadruplet_loss(w1, w2, w3, wy)
    jax.block_until_ready(loss3)
    ref3 = _reference(w1, w2, w3, wy)
    assert jnp.allclose(loss3, ref3, rtol=1e-3, atol=1e-3), (loss3, ref3)

    print("KERNEL_OK")
</pallas_src>

<mosaic_0001>
module attributes {stable_mosaic.version = 11 : i64} {
  func.func @_quadruplet_loss_kernel(%arg0: i32, %arg1: memref<8x32xf32, #tpu.memory_space<vmem>>, %arg2: memref<8x32xf32, #tpu.memory_space<vmem>>, %arg3: memref<8x32xf32, #tpu.memory_space<vmem>>, %arg4: memref<8x32xf32, #tpu.memory_space<vmem>>, %arg5: memref<1x1xf32, #tpu.memory_space<smem>>) attributes {dimension_semantics = [#tpu.dimension_semantics<parallel>], iteration_bounds = array<i64: 1>, scalar_prefetch = 0 : i64, scratch_operands = 0 : i64, tpu.core_type = #tpu.core_type<tc>, window_params = [{transform_indices = @transform_0, window_bounds = array<i64: 8, 32>}, {transform_indices = @transform_1, window_bounds = array<i64: 8, 32>}, {transform_indices = @transform_2, window_bounds = array<i64: 8, 32>}, {transform_indices = @transform_3, window_bounds = array<i64: 8, 32>}, {transform_indices = @transform_4, window_bounds = array<i64: 1, 1>}]} {
    %c0 = arith.constant 0 : index
    %c0_0 = arith.constant 0 : index
    %0 = vector.load %arg1[%c0, %c0_0] : memref<8x32xf32, #tpu.memory_space<vmem>>, vector<8x32xf32>
    %c0_1 = arith.constant 0 : index
    %c0_2 = arith.constant 0 : index
    %1 = vector.load %arg2[%c0_1, %c0_2] : memref<8x32xf32, #tpu.memory_space<vmem>>, vector<8x32xf32>
    %c0_3 = arith.constant 0 : index
    %c0_4 = arith.constant 0 : index
    %2 = vector.load %arg3[%c0_3, %c0_4] : memref<8x32xf32, #tpu.memory_space<vmem>>, vector<8x32xf32>
    %c0_5 = arith.constant 0 : index
    %c0_6 = arith.constant 0 : index
    %3 = vector.load %arg4[%c0_5, %c0_6] : memref<8x32xf32, #tpu.memory_space<vmem>>, vector<8x32xf32>
    %4 = arith.subf %0, %1 : vector<8x32xf32>
    %5 = arith.subf %1, %2 : vector<8x32xf32>
    %6 = arith.addf %4, %5 : vector<8x32xf32>
    %7 = arith.subf %5, %4 : vector<8x32xf32>
    %cst = arith.constant 5.000000e-01 : f32
    %8 = vector.broadcast %cst : f32 to vector<8x32xf32>
    %9 = arith.mulf %7, %8 : vector<8x32xf32>
    %cst_7 = arith.constant 9.99999997E-7 : f32
    %10 = vector.broadcast %cst_7 : f32 to vector<8x32xf32>
    %11 = arith.addf %9, %10 : vector<8x32xf32>
    %12 = arith.mulf %11, %11 : vector<8x32xf32>
    %cst_8 = arith.constant dense<0.000000e+00> : vector<8xf32>
    %13 = vector.multi_reduction <add>, %12, %cst_8 [1] : vector<8x32xf32> to vector<8xf32>
    %14 = vector.shape_cast %13 : vector<8xf32> to vector<8x1xf32>
    %15 = math.sqrt %14 : vector<8x1xf32>
    %cst_9 = arith.constant 9.99999997E-7 : f32
    %16 = vector.broadcast %cst_9 : f32 to vector<8x32xf32>
    %17 = arith.addf %4, %16 : vector<8x32xf32>
    %18 = arith.mulf %17, %17 : vector<8x32xf32>
    %cst_10 = arith.constant dense<0.000000e+00> : vector<8xf32>
    %19 = vector.multi_reduction <add>, %18, %cst_10 [1] : vector<8x32xf32> to vector<8xf32>
    %20 = vector.shape_cast %19 : vector<8xf32> to vector<8x1xf32>
    %21 = math.sqrt %20 : vector<8x1xf32>
    %cst_11 = arith.constant 9.99999997E-7 : f32
    %22 = vector.broadcast %cst_11 : f32 to vector<8x32xf32>
    %23 = arith.addf %5, %22 : vector<8x32xf32>
    %24 = arith.mulf %23, %23 : vector<8x32xf32>
    %cst_12 = arith.constant dense<0.000000e+00> : vector<8xf32>
    %25 = vector.multi_reduction <add>, %24, %cst_12 [1] : vector<8x32xf32> to vector<8xf32>
    %26 = vector.shape_cast %25 : vector<8xf32> to vector<8x1xf32>
    %27 = math.sqrt %26 : vector<8x1xf32>
    %cst_13 = arith.constant 9.99999997E-7 : f32
    %28 = vector.broadcast %cst_13 : f32 to vector<8x32xf32>
    %29 = arith.addf %6, %28 : vector<8x32xf32>
    %30 = arith.mulf %29, %29 : vector<8x32xf32>
    %cst_14 = arith.constant dense<0.000000e+00> : vector<8xf32>
    %31 = vector.multi_reduction <add>, %30, %cst_14 [1] : vector<8x32xf32> to vector<8xf32>
    %32 = vector.shape_cast %31 : vector<8xf32> to vector<8x1xf32>
    %33 = math.sqrt %32 : vector<8x1xf32>
    %34 = arith.subf %0, %3 : vector<8x32xf32>
    %cst_15 = arith.constant 9.99999997E-7 : f32
    %35 = vector.broadcast %cst_15 : f32 to vector<8x32xf32>
    %36 = arith.addf %34, %35 : vector<8x32xf32>
    %37 = arith.mulf %36, %36 : vector<8x32xf32>
    %cst_16 = arith.constant dense<0.000000e+00> : vector<8xf32>
    %38 = vector.multi_reduction <add>, %37, %cst_16 [1] : vector<8x32xf32> to vector<8xf32>
    %39 = vector.shape_cast %38 : vector<8xf32> to vector<8x1xf32>
    %40 = math.sqrt %39 : vector<8x1xf32>
    %41 = arith.addf %21, %27 : vector<8x1xf32>
    %42 = arith.addf %41, %33 : vector<8x1xf32>
    %cst_17 = arith.constant 2.500000e-01 : f32
    %43 = vector.broadcast %cst_17 : f32 to vector<8x1xf32>
    %44 = arith.mulf %43, %42 : vector<8x1xf32>
    %45 = arith.addf %15, %44 : vector<8x1xf32>
    %46 = arith.subf %33, %40 : vector<8x1xf32>
    %cst_18 = arith.constant 5.000000e+00 : f32
    %47 = vector.broadcast %cst_18 : f32 to vector<8x1xf32>
    %48 = arith.addf %46, %47 : vector<8x1xf32>
    %cst_19 = arith.constant 0.000000e+00 : f32
    %49 = vector.broadcast %cst_19 : f32 to vector<8x1xf32>
    %50 = arith.maximumf %48, %49 : vector<8x1xf32>
    %cst_20 = arith.constant 2.500000e-01 : f32
    %51 = vector.broadcast %cst_20 : f32 to vector<8x1xf32>
    %52 = arith.mulf %51, %45 : vector<8x1xf32>
    %53 = arith.addf %52, %50 : vector<8x1xf32>
    %54 = vector.shape_cast %53 : vector<8x1xf32> to vector<1x8x1xf32>
    %cst_21 = arith.constant dense<0.000000e+00> : vector<1xf32>
    %55 = vector.multi_reduction <add>, %54, %cst_21 [1, 2] : vector<1x8x1xf32> to vector<1xf32>
    %56 = vector.shape_cast %55 : vector<1xf32> to vector<1x1x1xf32>
    %57 = vector.extract %56[0, 0, 0] : f32 from vector<1x1x1xf32>
    %c0_22 = arith.constant 0 : index
    %c0_23 = arith.constant 0 : index
    %58 = memref.load %arg5[%c0_22, %c0_23] : memref<1x1xf32, #tpu.memory_space<smem>>
    memref.store %57, %arg5[%c0_22, %c0_23] : memref<1x1xf32, #tpu.memory_space<smem>>
    return
  }
  func.func @transform_0(%arg0: i32) -> (i32, i32) {
    %c0_i32 = arith.constant 0 : i32
    %c0_i32_0 = arith.constant 0 : i32
    return %arg0, %c0_i32 : i32, i32
  }
  func.func @transform_1(%arg0: i32) -> (i32, i32) {
    %c0_i32 = arith.constant 0 : i32
    %c0_i32_0 = arith.constant 0 : i32
    return %arg0, %c0_i32 : i32, i32
  }
  func.func @transform_2(%arg0: i32) -> (i32, i32) {
    %c0_i32 = arith.constant 0 : i32
    %c0_i32_0 = arith.constant 0 : i32
    return %arg0, %c0_i32 : i32, i32
  }
  func.func @transform_3(%arg0: i32) -> (i32, i32) {
    %c0_i32 = arith.constant 0 : i32
    %c0_i32_0 = arith.constant 0 : i32
    return %arg0, %c0_i32 : i32, i32
  }
  func.func @transform_4(%arg0: i32) -> (i32, i32) {
    %c0_i32 = arith.constant 0 : i32
    %c0_i32_0 = arith.constant 0 : i32
    return %arg0, %c0_i32 : i32, i32
  }
}

</mosaic_0001>

<llo_original>
// kernel: tpu_custom_call.1
$region0: #{tpu_custom_call.1}
  #allocation0 [shape = 'u32[]', space=smem, size = 0x4, offset = 0x4, fixed_abs, tag = 'smem constant byte address 0x4 - core index']
  #allocation1 [shape = 'u32[72,128]{1,0:T(1,128)}', space=vmem, size = 0x9000, scoped, tag = 'internal scratch']
  %s0 = inlined_call_operand.hbm [shape: f32[8,32], index: 0, kind: input, shape index: {}]
  %s1 = inlined_call_operand.hbm [shape: f32[8,32], index: 1, kind: input, shape index: {}]
  %s2 = inlined_call_operand.hbm [shape: f32[8,32], index: 2, kind: input, shape index: {}]
  %s3 = inlined_call_operand.hbm [shape: f32[8,32], index: 3, kind: input, shape index: {}]
  %s4 = inlined_call_operand.hbm [shape: f32[1,1], index: 4, kind: output, shape index: {}]
  %s5 = sld [smem:[#allocation0]]
  $region42: #{tpu_custom_call.1} parent=0
    _
  %s7 = ssub.s32 1, %s5
  %s8 = scalar_select 0, %s7, %s5
  $region1: #{tpu_custom_call.1} parent=0
    #allocation2 [shape = 'u8[4096]{0}', space=vmem, size = 0x1000, scoped, tag = 'input window, operand 0, single buffered']
    #allocation3 [shape = 's32[1]{0}', space=sflag, size = 0x4, scoped, tag = 'scoped memory for tpu_custom_call.1']
    #allocation4 [shape = 's32[1]{0}', space=sflag, size = 0x4, scoped, tag = 'scoped memory for tpu_custom_call.1']
    #allocation5 [shape = 'u8[4096]{0}', space=vmem, size = 0x1000, scoped, tag = 'input window, operand 1, single buffered']
    #allocation6 [shape = 's32[1]{0}', space=sflag, size = 0x4, scoped, tag = 'scoped memory for tpu_custom_call.1']
    #allocation7 [shape = 'u8[4096]{0}', space=vmem, size = 0x1000, scoped, tag = 'input window, operand 2, single buffered']
    #allocation8 [shape = 'u8[4096]{0}', space=vmem, size = 0x1000, scoped, tag = 'input window, operand 3, single buffered']
    #allocation9 [shape = 's32[1]{0}', space=sflag, size = 0x4, scoped, tag = 'scoped memory for tpu_custom_call.1']
    #allocation10 [shape = 'u8[512]{0}', space=smem, size = 0x200, scoped, tag = 'output window, operand 0, single buffered']
    %9 = vsyncpa [#allocation3], 0
    %10 = vsyncpa [#allocation6], 0
    %11 = vsyncpa [#allocation9], 0
    %12 = vsyncpa [#allocation4], 0
    // Predicated region
    $region2: #{tpu_custom_call.1} parent=1 // pred_check
      _
    $region3: #{tpu_custom_call.1} parent=1 // pred_check_branch
      %14 = sbr.rel (0) target = $region5
    $region4: #{tpu_custom_call.1} parent=1 // pred_region
      %16 = vsyncadd [#allocation3], 0
      %s18 = sshll.u32 %s0, 4
      %s19 = int_to_ptr.hbm [resolvable:$true] %s18
      %s20 = sshll.u32 [#allocation2], 4
      %s21 = int_to_ptr.vmem [resolvable:$true] %s20
      %23 = dma.hbm_to_vmem [thread:$0]  %s19, 128, %s21, [#allocation3]
    $region5: #{tpu_custom_call.1} parent=1 // pred_fallthru
      _
    // Predicated region
    $region6: #{tpu_custom_call.1} parent=1 // pred_check
      _
    $region7: #{tpu_custom_call.1} parent=1 // pred_check_branch
      %25 = sbr.rel (0) target = $region9
    $region8: #{tpu_custom_call.1} parent=1 // pred_region
      %27 = vsyncadd [#allocation6], 0
      %s29 = sshll.u32 %s1, 4
      %s30 = int_to_ptr.hbm [resolvable:$true] %s29
      %s31 = sshll.u32 [#allocation5], 4
      %s32 = int_to_ptr.vmem [resolvable:$true] %s31
      %34 = dma.hbm_to_vmem [thread:$0]  %s30, 128, %s32, [#allocation6]
    $region9: #{tpu_custom_call.1} parent=1 // pred_fallthru
      _
    // Predicated region
    $region10: #{tpu_custom_call.1} parent=1 // pred_check
      _
    $region11: #{tpu_custom_call.1} parent=1 // pred_check_branch
      %36 = sbr.rel (0) target = $region13
    $region12: #{tpu_custom_call.1} parent=1 // pred_region
      %38 = vsyncadd [#allocation6], 0
      %s40 = sshll.u32 %s2, 4
      %s41 = int_to_ptr.hbm [resolvable:$true] %s40
      %s42 = sshll.u32 [#allocation7], 4
      %s43 = int_to_ptr.vmem [resolvable:$true] %s42
      %45 = dma.hbm_to_vmem [thread:$0]  %s41, 128, %s43, [#allocation6]
    $region13: #{tpu_custom_call.1} parent=1 // pred_fallthru
      _
    // Predicated region
    $region14: #{tpu_custom_call.1} parent=1 // pred_check
      _
    $region15: #{tpu_custom_call.1} parent=1 // pred_check_branch
      %47 = sbr.rel (0) target = $region17
    $region16: #{tpu_custom_call.1} parent=1 // pred_region
      %49 = vsyncadd [#allocation9], 0
      %s51 = sshll.u32 %s3, 4
      %s52 = int_to_ptr.hbm [resolvable:$true] %s51
      %s53 = sshll.u32 [#allocation8], 4
      %s54 = int_to_ptr.vmem [resolvable:$true] %s53
      %56 = dma.hbm_to_vmem [thread:$0]  %s52, 128, %s54, [#allocation9]
    $region17: #{tpu_custom_call.1} parent=1 // pred_fallthru
      _
    // Predicated region
    $region18: #{tpu_custom_call.1} parent=1 // pred_check
      _
    $region19: #{tpu_custom_call.1} parent=1 // pred_check_branch
      %58 = sbr.rel (0) target = $region21
    $region20: #{tpu_custom_call.1} parent=1 // pred_region
      %60 = dma.done [#allocation3], 128
    $region21: #{tpu_custom_call.1} parent=1 // pred_fallthru
      _
    // Predicated region
    $region22: #{tpu_custom_call.1} parent=1 // pred_check
      _
    $region23: #{tpu_custom_call.1} parent=1 // pred_check_branch
      %62 = sbr.rel (0) target = $region25
    $region24: #{tpu_custom_call.1} parent=1 // pred_region
      %64 = dma.done [#allocation6], 128
    $region25: #{tpu_custom_call.1} parent=1 // pred_fallthru
      _
    // Predicated region
    $region26: #{tpu_custom_call.1} parent=1 // pred_check
      _
    $region27: #{tpu_custom_call.1} parent=1 // pred_check_branch
      %66 = sbr.rel (0) target = $region29
    $region28: #{tpu_custom_call.1} parent=1 // pred_region
      %68 = dma.done [#allocation6], 128
    $region29: #{tpu_custom_call.1} parent=1 // pred_fallthru
      _
    // Predicated region
    $region30: #{tpu_custom_call.1} parent=1 // pred_check
      _
    $region31: #{tpu_custom_call.1} parent=1 // pred_check_branch
      %70 = sbr.rel (0) target = $region33
    $region32: #{tpu_custom_call.1} parent=1 // pred_region
      %72 = dma.done [#allocation9], 128
    $region33: #{tpu_custom_call.1} parent=1 // pred_fallthru
      _
    %v73 = vld [vmem:[#allocation2] sm:$0xff]
    %v74 = vld [vmem:[#allocation5] sm:$0xff]
    %v75 = vld [vmem:[#allocation7] sm:$0xff]
    %v76 = vld [vmem:[#allocation8] sm:$0xff]
    %v77 = vsub.f32 %v73, %v74
    %v78 = vsub.f32 %v74, %v75
    %v79 = vadd.f32 %v77, %v78
    %v80 = vsub.f32 %v78, %v77
    %v81 = vmul.f32 %v80, 0.5
    %v82 = vadd.f32 %v81, 1e-06
    %v83 = vmul.f32 %v82, %v82
    %vm84 = vcmask 261120
    %v85 = vsel %vm84, %v83, 0.0
    %86 = vadd.xlane.f32.xlu0 %v85
    %v87 = vpop.xlane.xlu0 %86
    %v88 = vrsqrt.pop %v87
    %v89 = vmul.f32 %v88, %v87
    %v90 = vmul.f32 %v89, %v88
    %v91 = vmul.f32 0.5, %v90
    %v92 = vsub.f32 1.5, %v91
    %v93 = vmul.f32 %v88, %v92
    %v94 = vmul.f32 %v87, %v93
    %vm95 = vcmp.eq.f32.partialorder %v87, inf
    %v96 = vsel %vm95, %v87, %v94
    %vm97 = vcmp.eq.f32.partialorder %v87, 0.0
    %v98 = vand.u32 %v87, 2147483648
    %v99 = vsel %vm97, %v98, %v96
    %v100 = vadd.f32 %v77, 1e-06
    %v101 = vmul.f32 %v100, %v100
    %v102 = vsel %vm84, %v101, 0.0
    %103 = vadd.xlane.f32.xlu0 %v102
    %v104 = vpop.xlane.xlu0 %103
    %v105 = vrsqrt.pop %v104
    %v106 = vmul.f32 %v105, %v104
    %v107 = vmul.f32 %v106, %v105
    %v108 = vmul.f32 0.5, %v107
    %v109 = vsub.f32 1.5, %v108
    %v110 = vmul.f32 %v105, %v109
    %v111 = vmul.f32 %v104, %v110
    %vm112 = vcmp.eq.f32.partialorder %v104, inf
    %v113 = vsel %vm112, %v104, %v111
    %vm114 = vcmp.eq.f32.partialorder %v104, 0.0
    %v115 = vand.u32 %v104, 2147483648
    %v116 = vsel %vm114, %v115, %v113
    %v117 = vadd.f32 %v78, 1e-06
    %v118 = vmul.f32 %v117, %v117
    %v119 = vsel %vm84, %v118, 0.0
    %120 = vadd.xlane.f32.xlu0 %v119
    %v121 = vpop.xlane.xlu0 %120
    %v122 = vrsqrt.pop %v121
    %v123 = vmul.f32 %v122, %v121
    %v124 = vmul.f32 %v123, %v122
    %v125 = vmul.f32 0.5, %v124
    %v126 = vsub.f32 1.5, %v125
    %v127 = vmul.f32 %v122, %v126
    %v128 = vmul.f32 %v121, %v127
    %vm129 = vcmp.eq.f32.partialorder %v121, inf
    %v130 = vsel %vm129, %v121, %v128
    %vm131 = vcmp.eq.f32.partialorder %v121, 0.0
    %v132 = vand.u32 %v121, 2147483648
    %v133 = vsel %vm131, %v132, %v130
    %v134 = vadd.f32 %v79, 1e-06
    %v135 = vmul.f32 %v134, %v134
    %v136 = vsel %vm84, %v135, 0.0
    %137 = vadd.xlane.f32.xlu0 %v136
    %v138 = vpop.xlane.xlu0 %137
    %v139 = vrsqrt.pop %v138
    %v140 = vmul.f32 %v139, %v138
    %v141 = vmul.f32 %v140, %v139
    %v142 = vmul.f32 0.5, %v141
    %v143 = vsub.f32 1.5, %v142
    %v144 = vmul.f32 %v139, %v143
    %v145 = vmul.f32 %v138, %v144
    %vm146 = vcmp.eq.f32.partialorder %v138, inf
    %v147 = vsel %vm146, %v138, %v145
    %vm148 = vcmp.eq.f32.partialorder %v138, 0.0
    %v149 = vand.u32 %v138, 2147483648
    %v150 = vsel %vm148, %v149, %v147
    %v151 = vsub.f32 %v73, %v76
    %v152 = vadd.f32 %v151, 1e-06
    %v153 = vmul.f32 %v152, %v152
    %v154 = vsel %vm84, %v153, 0.0
    %155 = vadd.xlane.f32.xlu0 %v154
    %v156 = vpop.xlane.xlu0 %155
    %v157 = vrsqrt.pop %v156
    %v158 = vmul.f32 %v157, %v156
    %v159 = vmul.f32 %v158, %v157
    %v160 = vmul.f32 0.5, %v159
    %v161 = vsub.f32 1.5, %v160
    %v162 = vmul.f32 %v157, %v161
    %v163 = vmul.f32 %v156, %v162
    %vm164 = vcmp.eq.f32.partialorder %v156, inf
    %v165 = vsel %vm164, %v156, %v163
    %vm166 = vcmp.eq.f32.partialorder %v156, 0.0
    %v167 = vand.u32 %v156, 2147483648
    %v168 = vsel %vm166, %v167, %v165
    %v169 = vadd.f32 %v116, %v133
    %v170 = vadd.f32 %v169, %v150
    %v171 = vmul.f32 %v170, 0.25
    %v172 = vadd.f32 %v99, %v171
    %v173 = vsub.f32 %v150, %v168
    %v174 = vadd.f32 %v173, 5.0
    %v175 = vmax.f32 %v174, 0.0
    %v176 = vmul.f32 %v172, 0.25
    %v177 = vadd.f32 %v176, %v175
    %vm178 = vcmask 7168
    %v179 = vsel %vm178, %v177, 0.0
    %180 = vadd.xlane.f32.xlu0 %v179
    %v181 = vpop.xlane.xlu0 %180
    %v182 = vrot.slane %v181, 4
    %v183 = vadd.f32 %v181, %v182
    %v184 = vrot.slane %v183, 2
    %v185 = vadd.f32 %v183, %v184
    %v186 = vrot.slane %v185, 1
    %v187 = vadd.f32 %v185, %v186
    %s188 = vtos %v187
    %s189 = scalar_lea.smem [#allocation10], 0
    %190 = sst [smem:[%s189]] %s188
    // Predicated region
    $region34: #{tpu_custom_call.1} parent=1 // pred_check
      _
    $region35: #{tpu_custom_call.1} parent=1 // pred_check_branch
      %192 = sbr.rel (0) target = $region37
    $region36: #{tpu_custom_call.1} parent=1 // pred_region
      %194 = vsyncadd [#allocation4], 0
      %s196 = sshll.u32 %s4, 4
      %s197 = int_to_ptr.hbm [resolvable:$true] %s196
      %199 = dma.smem_to_hbm [#allocation10], 16, %s197, [#allocation4]
    $region37: #{tpu_custom_call.1} parent=1 // pred_fallthru
      _
    // Predicated region
    $region38: #{tpu_custom_call.1} parent=1 // pred_check
      _
    $region39: #{tpu_custom_call.1} parent=1 // pred_check_branch
      %201 = sbr.rel (0) target = $region41
    $region40: #{tpu_custom_call.1} parent=1 // pred_region
      %203 = dma.done [#allocation4], 16
    $region41: #{tpu_custom_call.1} parent=1 // pred_fallthru
      _
    %204 = sfence
    %205 = vsyncpa [#allocation3], 1
    %206 = vsyncpa [#allocation6], 1
    %207 = vsyncpa [#allocation9], 1
    %208 = vsyncpa [#allocation4], 1

</llo_original>
